<compile_context>
chip_gen: v6e
topology: v6e:2x2x1
jax: 0.10.0
libtpu: 0.0.40
codegen_flags: <defaults>
</compile_context>

<pallas_src>
import functools

import jax
import jax.numpy as jnp
from jax.experimental import pallas as pl
from jax.experimental.pallas import tpu as pltpu

BN_EPS = 1e-5
LANE = 128
MIB = 1 << 20


def _round_up(x, m):
    return ((x + m - 1) // m) * m


def _vmem_capacity_bytes():
    try:
        return int(pltpu.get_tpu_info().vmem_capacity_bytes)
    except Exception:
        return 64 * MIB  # conservative per-core figure (v7x)


def qmlp_kernel(x_ref, w1_ref, s1_ref, t1_ref, w2_ref, b2_ref, o_ref,
                *, hid_chunk, mxu_dtype):
    # x_ref : (TB, IN_p)     activation tile (original dtype; cast in-kernel)
    # w1_ref: (IN_p, HID_p)  W1^T, MXU dtype, grid-invariant (single-buffered)
    # s1_ref: (1, HID_p)     f32 BN scale  gamma * rsqrt(var + eps)
    # t1_ref: (1, HID_p)     f32 shift     (b1 - mean) * scale + beta
    # w2_ref: (HID_p, OUT_p) W2^T, MXU dtype, grid-invariant
    # b2_ref: (1, OUT_p)     f32
    # o_ref : (TB, OUT_p)    output tile (serving dtype)
    x = x_ref[...].astype(mxu_dtype)          # cast hidden under the MXU
    tb = x.shape[0]
    hid_p = w1_ref.shape[1]
    out_p = o_ref.shape[1]
    acc = jnp.zeros((tb, out_p), jnp.float32)
    # Chunk the hidden dim so the f32 intermediate stays small and the
    # bias/BN/ReLU epilogue overlaps the second matmul's MXU passes.
    for lo in range(0, hid_p, hid_chunk):
        hi = lo + hid_chunk
        h = jnp.dot(x, w1_ref[:, lo:hi], preferred_element_type=jnp.float32)
        # eval-mode BatchNorm1d as an f32 affine epilogue, then ReLU.
        h = jnp.maximum(h * s1_ref[:, lo:hi] + t1_ref[:, lo:hi], 0.0)
        # QDropout / QLowMemDropout are identity at inference.
        acc = acc + jnp.dot(h.astype(mxu_dtype), w2_ref[lo:hi, :],
                            preferred_element_type=jnp.float32)
    o_ref[...] = (acc + b2_ref[...]).astype(o_ref.dtype)


def prepare_qmodule_params(params, *, mxu_dtype=jnp.float32):
    """One-time (model-load) prep: transpose, lane-pad, cast.  Never per-call."""
    w1, b1, gamma, beta, mean, var, w2, b2 = params
    HID, IN = w1.shape
    OUT = w2.shape[0]
    IN_p, HID_p, OUT_p = (_round_up(d, LANE) for d in (IN, HID, OUT))

    scale = gamma * jax.lax.rsqrt(var + BN_EPS)       # (HID,) f32
    shift = (b1 - mean) * scale + beta                # (HID,) f32

    w1p = jnp.pad(w1.T, ((0, IN_p - IN), (0, HID_p - HID))).astype(mxu_dtype)
    w2p = jnp.pad(w2.T, ((0, HID_p - HID), (0, OUT_p - OUT))).astype(mxu_dtype)
    s1p = jnp.pad(scale, (0, HID_p - HID)).astype(jnp.float32).reshape(1, HID_p)
    t1p = jnp.pad(shift, (0, HID_p - HID)).astype(jnp.float32).reshape(1, HID_p)
    b2p = jnp.pad(b2, (0, OUT_p - OUT)).astype(jnp.float32).reshape(1, OUT_p)

    meta = dict(IN=IN, HID=HID, OUT=OUT, IN_p=IN_p, HID_p=HID_p, OUT_p=OUT_p,
                mxu_dtype=jnp.dtype(mxu_dtype))
    return (w1p, s1p, t1p, w2p, b2p), meta


def qmodule_forward(x, prepared, *, tb=None, out_dtype=None):
    """Fused QModule(MLP) forward.  x: (B, IN); `prepared` from
    prepare_qmodule_params (weights already padded / cast / transposed)."""
    (w1p, s1p, t1p, w2p, b2p), meta = prepared
    B, IN = x.shape
    assert IN == meta["IN"], "x feature dim does not match prepared params"
    IN_p, HID_p, OUT_p, OUT = meta["IN_p"], meta["HID_p"], meta["OUT_p"], meta["OUT"]
    mxu_dtype = meta["mxu_dtype"]
    out_dtype = jnp.dtype(out_dtype) if out_dtype is not None else x.dtype

    vmem_cap = _vmem_capacity_bytes()
    if tb is None:
        # 512-row tiles when VMEM is roomy (v5e/v6e: 128 MiB), 256 on v7x (64 MiB).
        tb = 512 if vmem_cap >= 96 * MIB else 256

    # Batch tile: align to the sublane packing of the tiled (x / out) blocks.
    sub = 16 if (out_dtype.itemsize == 2 or x.dtype.itemsize == 2) else 8
    tb_eff = max(sub, min(_round_up(tb, sub), _round_up(B, sub)))
    # Guarantee >= 2 grid steps so the ("parallel",) axis shards across both
    # v7x TensorCores instead of leaving one idle.
    if _round_up(B, tb_eff) // tb_eff == 1 and tb_eff >= 2 * sub:
        tb_eff = _round_up(tb_eff // 2, sub)
    B_p = _round_up(B, tb_eff)
    grid = (B_p // tb_eff,)

    # Per-call host work is only a (possible) zero-pad of x; the MXU-dtype
    # cast happens inside the kernel on the VMEM tile.
    xf = x if (B_p == B and IN_p == IN) else jnp.pad(x, ((0, B_p - B), (0, IN_p - IN)))

    hid_chunk = min(HID_p, 512)
    kernel = functools.partial(qmlp_kernel, hid_chunk=hid_chunk, mxu_dtype=mxu_dtype)

    mxu_b = jnp.dtype(mxu_dtype).itemsize
    w_bytes = (IN_p * HID_p + HID_p * OUT_p) * mxu_b
    vec_bytes = (2 * HID_p + OUT_p) * 4

    def run(single_buffer_weights):
        if single_buffer_weights:
            inv = lambda shape: pl.BlockSpec(shape, lambda i: (0, 0),
                                             pipeline_mode=pl.Buffered(1))
        else:
            inv = lambda shape: pl.BlockSpec(shape, lambda i: (0, 0))
        nbuf_w = 1 if single_buffer_weights else 2
        vmem_needed = (2 * tb_eff * IN_p * x.dtype.itemsize        # x tile, double-buffered
                       + 2 * tb_eff * OUT_p * out_dtype.itemsize   # out tile, double-buffered
                       + nbuf_w * (w_bytes + vec_bytes)            # resident params
                       + tb_eff * hid_chunk * 4                    # h intermediate
                       + tb_eff * OUT_p * 4)                       # f32 accumulator
        vmem_limit = int(min(vmem_cap,
                             max(int(vmem_needed * 1.5) + 2 * MIB, 16 * MIB)))
        return pl.pallas_call(
            kernel,
            out_shape=jax.ShapeDtypeStruct((B_p, OUT_p), out_dtype),
            grid_spec=pl.GridSpec(
                grid=grid,
                in_specs=[
                    pl.BlockSpec((tb_eff, IN_p), lambda i: (i, 0)),  # x batch tile
                    inv((IN_p, HID_p)),                              # W1^T (resident)
                    inv((1, HID_p)),                                 # BN scale
                    inv((1, HID_p)),                                 # BN shift (+ bias)
                    inv((HID_p, OUT_p)),                             # W2^T (resident)
                    inv((1, OUT_p)),                                 # b2
                ],
                out_specs=pl.BlockSpec((tb_eff, OUT_p), lambda i: (i, 0)),
            ),
            compiler_params=pltpu.CompilerParams(
                dimension_semantics=("parallel",),
                vmem_limit_bytes=vmem_limit),
        )(xf, w1p, s1p, t1p, w2p, b2p)

    try:
        out = run(True)       # single-buffered grid-invariant weights
    except Exception:
        out = run(False)      # fallback: default double-buffering
    return out[:B, :OUT]


def reference_forward(x, params):
    """Plain-JAX f32 reference of the same forward (for sanity check)."""
    w1, b1, gamma, beta, mean, var, w2, b2 = params
    h = x @ w1.T + b1
    h = (h - mean) / jnp.sqrt(var + BN_EPS) * gamma + beta
    h = jnp.maximum(h, 0.0)
    return h @ w2.T + b2


if __name__ == "__main__":
    B, IN, HID, OUT = 16, 32, 64, 32

    key = jax.random.PRNGKey(0)
    kx, k1, kb1, k2, kb2, km, kv = jax.random.split(key, 7)

    x = jax.random.normal(kx, (B, IN), dtype=jnp.float32)

    # Deterministic synthetic parameters (shapes from the module's layers).
    w1 = jax.random.normal(k1, (HID, IN), dtype=jnp.float32) * (1.0 / IN ** 0.5)
    b1 = jax.random.normal(kb1, (HID,), dtype=jnp.float32) * 0.1
    gamma = jnp.ones((HID,), jnp.float32)
    beta = jnp.zeros((HID,), jnp.float32)
    mean = jax.random.normal(km, (HID,), dtype=jnp.float32) * 0.05
    var = jnp.abs(jax.random.normal(kv, (HID,), dtype=jnp.float32)) + 0.5
    w2 = jax.random.normal(k2, (OUT, HID), dtype=jnp.float32) * (1.0 / HID ** 0.5)
    b2 = jax.random.normal(kb2, (OUT,), dtype=jnp.float32) * 0.1

    params = (w1, b1, gamma, beta, mean, var, w2, b2)
    ref = reference_forward(x, params)

    # Fidelity mode (default): f32 MXU operands + f32 output -- matches the
    # module's "identical inference math" claim.
    prep_f32 = prepare_qmodule_params(params, mxu_dtype=jnp.float32)
    out_f32 = jax.block_until_ready(qmodule_forward(x, prep_f32))
    assert out_f32.shape == (B, OUT)
    assert jnp.allclose(out_f32, ref, atol=1e-4, rtol=1e-4), "f32 mismatch"

    # Opt-in fast path: bf16 MXU operands + bf16 serving output (f32
    # accumulation, f32 BN/bias epilogue inside the kernel).
    prep_bf16 = prepare_qmodule_params(params, mxu_dtype=jnp.bfloat16)
    out_bf16 = jax.block_until_ready(
        qmodule_forward(x, prep_bf16, out_dtype=jnp.bfloat16))
    assert out_bf16.shape == (B, OUT)
    assert jnp.allclose(out_bf16.astype(jnp.float32), ref,
                        atol=5e-2, rtol=5e-2), "bf16 mismatch"

    # TODO(synk): graph-conv variants (QGCNConv/QGCN2Conv/QSAGEConv/QGENConv/
    # QCustomGATConv) need edge-index gather/scatter; not representable with
    # this dense BlockSpec pipeline.
    # TODO(synk): int8 (v5e/v6e) / fp8 (v7x) quantized-weight path would halve
    # weight DMA/VMEM; needs per-channel scale plumbing in the epilogue.
    print("KERNEL_OK")
</pallas_src>

<mosaic_0001>
module attributes {stable_mosaic.version = 11 : i64} {
  func.func @qmlp_kernel(%arg0: i32, %arg1: memref<8x128xf32, #tpu.memory_space<vmem>>, %arg2: memref<128x128xf32, #tpu.memory_space<vmem>>, %arg3: memref<1x128xf32, #tpu.memory_space<vmem>>, %arg4: memref<1x128xf32, #tpu.memory_space<vmem>>, %arg5: memref<128x128xf32, #tpu.memory_space<vmem>>, %arg6: memref<1x128xf32, #tpu.memory_space<vmem>>, %arg7: memref<8x128xf32, #tpu.memory_space<vmem>>) attributes {dimension_semantics = [#tpu.dimension_semantics<parallel>], iteration_bounds = array<i64: 2>, scalar_prefetch = 0 : i64, scratch_operands = 0 : i64, tpu.core_type = #tpu.core_type<tc>, window_params = [{transform_indices = @transform_0, window_bounds = array<i64: 8, 128>}, {pipeline_mode = #tpu.pipeline_mode<synchronous>, transform_indices = @transform_1, window_bounds = array<i64: 128, 128>}, {pipeline_mode = #tpu.pipeline_mode<synchronous>, transform_indices = @transform_2, window_bounds = array<i64: 1, 128>}, {pipeline_mode = #tpu.pipeline_mode<synchronous>, transform_indices = @transform_3, window_bounds = array<i64: 1, 128>}, {pipeline_mode = #tpu.pipeline_mode<synchronous>, transform_indices = @transform_4, window_bounds = array<i64: 128, 128>}, {pipeline_mode = #tpu.pipeline_mode<synchronous>, transform_indices = @transform_5, window_bounds = array<i64: 1, 128>}, {transform_indices = @transform_6, window_bounds = array<i64: 8, 128>}]} {
    %c0 = arith.constant 0 : index
    %c0_0 = arith.constant 0 : index
    %0 = vector.load %arg1[%c0, %c0_0] : memref<8x128xf32, #tpu.memory_space<vmem>>, vector<8x128xf32>
    %cst = arith.constant 0.000000e+00 : f32
    %1 = vector.broadcast %cst : f32 to vector<8x128xf32>
    %c0_1 = arith.constant 0 : index
    %c0_2 = arith.constant 0 : index
    %2 = vector.load %arg2[%c0_1, %c0_2] : memref<128x128xf32, #tpu.memory_space<vmem>>, vector<128x128xf32>
    %cst_3 = arith.constant dense<0.000000e+00> : vector<8x128xf32>
    %3 = tpu.matmul %0, %2, %cst_3 {dimension_numbers = #tpu.dot_dimension_numbers<[1], [0], [0], [1], [0, 0, 1, 1], [], []>} : vector<8x128xf32>, vector<128x128xf32>, vector<8x128xf32> -> vector<8x128xf32>
    %c0_4 = arith.constant 0 : index
    %c0_5 = arith.constant 0 : index
    %4 = vector.load %arg3[%c0_4, %c0_5] : memref<1x128xf32, #tpu.memory_space<vmem>>, vector<1x128xf32>
    %5 = vector.broadcast %4 : vector<1x128xf32> to vector<8x128xf32>
    %6 = arith.mulf %3, %5 : vector<8x128xf32>
    %c0_6 = arith.constant 0 : index
    %c0_7 = arith.constant 0 : index
    %7 = vector.load %arg4[%c0_6, %c0_7] : memref<1x128xf32, #tpu.memory_space<vmem>>, vector<1x128xf32>
    %8 = vector.broadcast %7 : vector<1x128xf32> to vector<8x128xf32>
    %9 = arith.addf %6, %8 : vector<8x128xf32>
    %cst_8 = arith.constant 0.000000e+00 : f32
    %10 = vector.broadcast %cst_8 : f32 to vector<8x128xf32>
    %11 = arith.maximumf %9, %10 : vector<8x128xf32>
    %c0_9 = arith.constant 0 : index
    %c0_10 = arith.constant 0 : index
    %12 = vector.load %arg5[%c0_9, %c0_10] : memref<128x128xf32, #tpu.memory_space<vmem>>, vector<128x128xf32>
    %cst_11 = arith.constant dense<0.000000e+00> : vector<8x128xf32>
    %13 = tpu.matmul %11, %12, %cst_11 {dimension_numbers = #tpu.dot_dimension_numbers<[1], [0], [0], [1], [0, 0, 1, 1], [], []>} : vector<8x128xf32>, vector<128x128xf32>, vector<8x128xf32> -> vector<8x128xf32>
    %14 = arith.addf %1, %13 : vector<8x128xf32>
    %c0_12 = arith.constant 0 : index
    %c0_13 = arith.constant 0 : index
    %15 = vector.load %arg6[%c0_12, %c0_13] : memref<1x128xf32, #tpu.memory_space<vmem>>, vector<1x128xf32>
    %16 = vector.broadcast %15 : vector<1x128xf32> to vector<8x128xf32>
    %17 = arith.addf %14, %16 : vector<8x128xf32>
    %c0_14 = arith.constant 0 : index
    %c0_15 = arith.constant 0 : index
    %18 = vector.load %arg7[%c0_14, %c0_15] : memref<8x128xf32, #tpu.memory_space<vmem>>, vector<8x128xf32>
    tpu.vector_store %arg7[%c0_14, %c0_15], %17 {strides = array<i32>} : memref<8x128xf32, #tpu.memory_space<vmem>>, vector<8x128xf32>,
    return
  }
  func.func @transform_0(%arg0: i32) -> (i32, i32) {
    %c0_i32 = arith.constant 0 : i32
    %c0_i32_0 = arith.constant 0 : i32
    return %arg0, %c0_i32 : i32, i32
  }
  func.func @transform_1(%arg0: i32) -> (i32, i32) {
    %c0_i32 = arith.constant 0 : i32
    %c0_i32_0 = arith.constant 0 : i32
    %c0_i32_1 = arith.constant 0 : i32
    return %c0_i32, %c0_i32_0 : i32, i32
  }
  func.func @transform_2(%arg0: i32) -> (i32, i32) {
    %c0_i32 = arith.constant 0 : i32
    %c0_i32_0 = arith.constant 0 : i32
    %c0_i32_1 = arith.constant 0 : i32
    return %c0_i32, %c0_i32_0 : i32, i32
  }
  func.func @transform_3(%arg0: i32) -> (i32, i32) {
    %c0_i32 = arith.constant 0 : i32
    %c0_i32_0 = arith.constant 0 : i32
    %c0_i32_1 = arith.constant 0 : i32
    return %c0_i32, %c0_i32_0 : i32, i32
  }
  func.func @transform_4(%arg0: i32) -> (i32, i32) {
    %c0_i32 = arith.constant 0 : i32
    %c0_i32_0 = arith.constant 0 : i32
    %c0_i32_1 = arith.constant 0 : i32
    return %c0_i32, %c0_i32_0 : i32, i32
  }
  func.func @transform_5(%arg0: i32) -> (i32, i32) {
    %c0_i32 = arith.constant 0 : i32
    %c0_i32_0 = arith.constant 0 : i32
    %c0_i32_1 = arith.constant 0 : i32
    return %c0_i32, %c0_i32_0 : i32, i32
  }
  func.func @transform_6(%arg0: i32) -> (i32, i32) {
    %c0_i32 = arith.constant 0 : i32
    %c0_i32_0 = arith.constant 0 : i32
    return %arg0, %c0_i32 : i32, i32
  }
}

module attributes {stable_mosaic.version = 11 : i64} {
  func.func @qmlp_kernel(%arg0: i32, %arg1: memref<8x128xf32, #tpu.memory_space<vmem>>, %arg2: memref<128x128xf32, #tpu.memory_space<vmem>>, %arg3: memref<1x128xf32, #tpu.memory_space<vmem>>, %arg4: memref<1x128xf32, #tpu.memory_space<vmem>>, %arg5: memref<128x128xf32, #tpu.memory_space<vmem>>, %arg6: memref<1x128xf32, #tpu.memory_space<vmem>>, %arg7: memref<8x128xf32, #tpu.memory_space<vmem>>) attributes {dimension_semantics = [#tpu.dimension_semantics<parallel>], iteration_bounds = array<i64: 2>, scalar_prefetch = 0 : i64, scratch_operands = 0 : i64, tpu.core_type = #tpu.core_type<tc>, window_params = [{transform_indices = @transform_0, window_bounds = array<i64: 8, 128>}, {pipeline_mode = #tpu.pipeline_mode<synchronous>, transform_indices = @transform_1, window_bounds = array<i64: 128, 128>}, {pipeline_mode = #tpu.pipeline_mode<synchronous>, transform_indices = @transform_2, window_bounds = array<i64: 1, 128>}, {pipeline_mode = #tpu.pipeline_mode<synchronous>, transform_indices = @transform_3, window_bounds = array<i64: 1, 128>}, {pipeline_mode = #tpu.pipeline_mode<synchronous>, transform_indices = @transform_4, window_bounds = array<i64: 128, 128>}, {pipeline_mode = #tpu.pipeline_mode<synchronous>, transform_indices = @transform_5, window_bounds = array<i64: 1, 128>}, {transform_indices = @transform_6, window_bounds = array<i64: 8, 128>}]} {
    %c0 = arith.constant 0 : index
    %c0_0 = arith.constant 0 : index
    %0 = vector.load %arg1[%c0, %c0_0] : memref<8x128xf32, #tpu.memory_space<vmem>>, vector<8x128xf32>
    %cst = arith.constant 0.000000e+00 : f32
    %1 = vector.broadcast %cst : f32 to vector<8x128xf32>
    %c0_1 = arith.constant 0 : index
    %c0_2 = arith.constant 0 : index
    %2 = vector.load %arg2[%c0_1, %c0_2] : memref<128x128xf32, #tpu.memory_space<vmem>>, vector<128x128xf32>
    %cst_3 = arith.constant dense<0.000000e+00> : vector<8x128xf32>
    %3 = tpu.matmul %0, %2, %cst_3 {dimension_numbers = #tpu.dot_dimension_numbers<[1], [0], [0], [1], [0, 0, 1, 1], [], []>} : vector<8x128xf32>, vector<128x128xf32>, vector<8x128xf32> -> vector<8x128xf32>
    %c0_4 = arith.constant 0 : index
    %c0_5 = arith.constant 0 : index
    %4 = vector.load %arg3[%c0_4, %c0_5] : memref<1x128xf32, #tpu.memory_space<vmem>>, vector<1x128xf32>
    %5 = vector.broadcast %4 : vector<1x128xf32> to vector<8x128xf32>
    %6 = arith.mulf %3, %5 : vector<8x128xf32>
    %c0_6 = arith.constant 0 : index
    %c0_7 = arith.constant 0 : index
    %7 = vector.load %arg4[%c0_6, %c0_7] : memref<1x128xf32, #tpu.memory_space<vmem>>, vector<1x128xf32>
    %8 = vector.broadcast %7 : vector<1x128xf32> to vector<8x128xf32>
    %9 = arith.addf %6, %8 : vector<8x128xf32>
    %cst_8 = arith.constant 0.000000e+00 : f32
    %10 = vector.broadcast %cst_8 : f32 to vector<8x128xf32>
    %11 = arith.maximumf %9, %10 : vector<8x128xf32>
    %c0_9 = arith.constant 0 : index
    %c0_10 = arith.constant 0 : index
    %12 = vector.load %arg5[%c0_9, %c0_10] : memref<128x128xf32, #tpu.memory_space<vmem>>, vector<128x128xf32>
    %cst_11 = arith.constant dense<0.000000e+00> : vector<8x128xf32>
    %13 = tpu.matmul %11, %12, %cst_11 {dimension_numbers = #tpu.dot_dimension_numbers<[1], [0], [0], [1], [0, 0, 1, 1], [], []>} : vector<8x128xf32>, vector<128x128xf32>, vector<8x128xf32> -> vector<8x128xf32>
    %14 = arith.addf %1, %13 : vector<8x128xf32>
    %c0_12 = arith.constant 0 : index
    %c0_13 = arith.constant 0 : index
    %15 = vector.load %arg6[%c0_12, %c0_13] : memref<1x128xf32, #tpu.memory_space<vmem>>, vector<1x128xf32>
    %16 = vector.broadcast %15 : vector<1x128xf32> to vector<8x128xf32>
    %17 = arith.addf %14, %16 : vector<8x128xf32>
    %c0_14 = arith.constant 0 : index
    %c0_15 = arith.constant 0 : index
    %18 = vector.load %arg7[%c0_14, %c0_15] : memref<8x128xf32, #tpu.memory_space<vmem>>, vector<8x128xf32>
    tpu.vector_store %arg7[%c0_14, %c0_15], %17 {strides = array<i32>} : memref<8x128xf32, #tpu.memory_space<vmem>>, vector<8x128xf32>,
    return
  }
  func.func @transform_0(%arg0: i32) -> (i32, i32) {
    %c0_i32 = arith.constant 0 : i32
    %c0_i32_0 = arith.constant 0 : i32
    return %arg0, %c0_i32 : i32, i32
  }
  func.func @transform_1(%arg0: i32) -> (i32, i32) {
    %c0_i32 = arith.constant 0 : i32
    %c0_i32_0 = arith.constant 0 : i32
    %c0_i32_1 = arith.constant 0 : i32
    return %c0_i32, %c0_i32_0 : i32, i32
  }
  func.func @transform_2(%arg0: i32) -> (i32, i32) {
    %c0_i32 = arith.constant 0 : i32
    %c0_i32_0 = arith.constant 0 : i32
    %c0_i32_1 = arith.constant 0 : i32
    return %c0_i32, %c0_i32_0 : i32, i32
  }
  func.func @transform_3(%arg0: i32) -> (i32, i32) {
    %c0_i32 = arith.constant 0 : i32
    %c0_i32_0 = arith.constant 0 : i32
    %c0_i32_1 = arith.constant 0 : i32
    return %c0_i32, %c0_i32_0 : i32, i32
  }
  func.func @transform_4(%arg0: i32) -> (i32, i32) {
    %c0_i32 = arith.constant 0 : i32
    %c0_i32_0 = arith.constant 0 : i32
    %c0_i32_1 = arith.constant 0 : i32
    return %c0_i32, %c0_i32_0 : i32, i32
  }
  func.func @transform_5(%arg0: i32) -> (i32, i32) {
    %c0_i32 = arith.constant 0 : i32
    %c0_i32_0 = arith.constant 0 : i32
    %c0_i32_1 = arith.constant 0 : i32
    return %c0_i32, %c0_i32_0 : i32, i32
  }
  func.func @transform_6(%arg0: i32) -> (i32, i32) {
    %c0_i32 = arith.constant 0 : i32
    %c0_i32_0 = arith.constant 0 : i32
    return %arg0, %c0_i32 : i32, i32
  }
}

</mosaic_0001>

<llo_original>
// kernel: tpu_custom_call.1
$region0: #{tpu_custom_call.1}
  #allocation0 [shape = 'u32[]', space=smem, size = 0x4, offset = 0x4, fixed_abs, tag = 'smem constant byte address 0x4 - core index']
  #allocation1 [shape = 'u32[144,128]{1,0:T(1,128)}', space=vmem, size = 0x12000, scoped, tag = 'internal scratch']
  %s0 = inlined_call_operand.hbm [shape: f32[16,128], index: 0, kind: input, shape index: {}]
  %s1 = inlined_call_operand.hbm [shape: f32[128,128], index: 1, kind: input, shape index: {}]
  %s2 = inlined_call_operand.vmem [shape: f32[1,128], index: 2, kind: input, shape index: {}]
  %s3 = inlined_call_operand.vmem [shape: f32[1,128], index: 3, kind: input, shape index: {}]
  %s4 = inlined_call_operand.hbm [shape: f32[128,128], index: 4, kind: input, shape index: {}]
  %s5 = inlined_call_operand.vmem [shape: f32[1,128], index: 5, kind: input, shape index: {}]
  %s6 = inlined_call_operand.hbm [shape: f32[16,128], index: 6, kind: output, shape index: {}]
  %s7 = sld [smem:[#allocation0]]
  $region69: #{tpu_custom_call.1} parent=0
    _
  %s9 = ssub.s32 1, %s7
  %s10 = scalar_select 0, %s9, %s7
  $region1: #{tpu_custom_call.1} parent=0
    #allocation2 [shape = 'u8[8192]{0}', space=vmem, size = 0x2000, scoped, tag = 'input window, operand 0']
    #allocation3 [shape = 's32[2]{0}', space=sflag, size = 0x8, scoped, tag = 'scoped memory for tpu_custom_call.1']
    #allocation4 [shape = 's32[2]{0}', space=sflag, size = 0x8, scoped, tag = 'scoped memory for tpu_custom_call.1']
    #allocation5 [shape = 'u8[65536]{0}', space=vmem, size = 0x10000, scoped, tag = 'input window, operand 1, single buffered']
    #allocation6 [shape = 's32[1]{0}', space=sflag, size = 0x4, scoped, tag = 'scoped memory for tpu_custom_call.1']
    #allocation7 [shape = 'u8[65536]{0}', space=vmem, size = 0x10000, scoped, tag = 'input window, operand 4, single buffered']
    #allocation8 [shape = 'u8[8192]{0}', space=vmem, size = 0x2000, scoped, tag = 'output window, operand 0']
    %11 = vsyncpa [#allocation3], 0
    %s12 = scalar_lea.sflag [#allocation3], 1
    %13 = vsyncpa %s12, 0
    %14 = vsyncpa [#allocation6], 0
    %15 = vsyncpa [#allocation4], 0
    %s16 = scalar_lea.sflag [#allocation4], 1
    %17 = vsyncpa %s16, 0
    loop: start=0, step=1, limit=4
    $region2: #{tpu_custom_call.1} parent=1 // loop_pre_header
      _
    $region3: #{tpu_custom_call.1} parent=1 // loop_header
      %s19 = sphi 0, %s23
      %p20 = scmp.ge.s32.totalorder %s19, 4
      %s29 = sphi 0, %s31
      %s32 = sphi 0, %s29
      %s33 = sphi 0, %s32
      %s49 = sphi 0, %s33
      %s53 = sphi 0, %s53
      %s55 = sphi 0, %s53
      %s56 = sphi 0, %s55
      %s70 = sphi 0, %s56
      %s74 = sphi 0, %s74
      %s76 = sphi 0, %s74
      %s77 = sphi 0, %s76
      %s91 = sphi 0, %s77
      %s95 = sphi 0, %s95
      %s97 = sphi 0, %s95
      %s98 = sphi 0, %s97
      %s112 = sphi 0, %s98
      %s116 = sphi 0, %s116
      %s118 = sphi 0, %s116
      %s119 = sphi 0, %s118
      %s133 = sphi 0, %s119
      %s137 = sphi 0, %s137
      %s139 = sphi 0, %s137
      %s140 = sphi 0, %s139
      %s154 = sphi 0, %s140
      %s160 = sphi 0, %s162
      %s163 = sphi 0, %s160
      %s164 = sphi 0, %s163
      %s180 = sphi 0, %s164
    $region4: #{tpu_custom_call.1} parent=1 // loop_header_branch
      %22 = sbr.rel (%p20) target = $region8
    $region5: #{tpu_custom_call.1} parent=1 // loop_body
      %s24 = ssub.s32 %s19, 1
      %s25 = ssub.s32 %s19, 2
      %s26 = sadd.s32 %s19, 1
      %s27 = ssub.s32 %s19, %s26
      %p28 = scmp.eq.s32.totalorder %s27, 0
      %s30 = sadd.s32 %s29, 1
      %s31 = scalar_select %p28, %s29, %s30
      %p34 = pneg %p28
      %p35 = scmp.eq.s32.totalorder %s19, 1
      %p36 = por %p34, %p35
      %p37 = scmp.ne.s32.totalorder %s29, %s32
      %p38 = scmp.eq.s32.totalorder %s19, 0
      %p39 = por %p37, %p38
      %p40 = scmp.ne.s32.totalorder %s29, %s32
      %p41 = scmp.eq.s32.totalorder %s24, 1
      %p42 = por %p40, %p41
      %p43 = scmp.ne.s32.totalorder %s32, %s33
      %p44 = scmp.eq.s32.totalorder %s24, 0
      %p45 = por %p43, %p44
      %p46 = scmp.ne.s32.totalorder %s32, %s33
      %p47 = scmp.eq.s32.totalorder %s25, 1
      %p48 = por %p46, %p47
      %p50 = scmp.ne.s32.totalorder %s33, %s49
      %p51 = scmp.eq.s32.totalorder %s25, 0
      %p52 = por %p50, %p51
      %s54 = sadd.s32 %s53, 1
      %p57 = scmp.eq.s32.totalorder %s19, 1
      %p58 = scmp.ne.s32.totalorder %s53, %s55
      %p59 = scmp.eq.s32.totalorder %s19, 0
      %p60 = por %p58, %p59
      %p61 = scmp.ne.s32.totalorder %s53, %s55
      %p62 = scmp.eq.s32.totalorder %s24, 1
      %p63 = por %p61, %p62
      %p64 = scmp.ne.s32.totalorder %s55, %s56
      %p65 = scmp.eq.s32.totalorder %s24, 0
      %p66 = por %p64, %p65
      %p67 = scmp.ne.s32.totalorder %s55, %s56
      %p68 = scmp.eq.s32.totalorder %s25, 1
      %p69 = por %p67, %p68
      %p71 = scmp.ne.s32.totalorder %s56, %s70
      %p72 = scmp.eq.s32.totalorder %s25, 0
      %p73 = por %p71, %p72
      %s75 = sadd.s32 %s74, 1
      %p78 = scmp.eq.s32.totalorder %s19, 1
      %p79 = scmp.ne.s32.totalorder %s74, %s76
      %p80 = scmp.eq.s32.totalorder %s19, 0
      %p81 = por %p79, %p80
      %p82 = scmp.ne.s32.totalorder %s74, %s76
      %p83 = scmp.eq.s32.totalorder %s24, 1
      %p84 = por %p82, %p83
      %p85 = scmp.ne.s32.totalorder %s76, %s77
      %p86 = scmp.eq.s32.totalorder %s24, 0
      %p87 = por %p85, %p86
      %p88 = scmp.ne.s32.totalorder %s76, %s77
      %p89 = scmp.eq.s32.totalorder %s25, 1
      %p90 = por %p88, %p89
      %p92 = scmp.ne.s32.totalorder %s77, %s91
      %p93 = scmp.eq.s32.totalorder %s25, 0
      %p94 = por %p92, %p93
      %s96 = sadd.s32 %s95, 1
      %p99 = scmp.eq.s32.totalorder %s19, 1
      %p100 = scmp.ne.s32.totalorder %s95, %s97
      %p101 = scmp.eq.s32.totalorder %s19, 0
      %p102 = por %p100, %p101
      %p103 = scmp.ne.s32.totalorder %s95, %s97
      %p104 = scmp.eq.s32.totalorder %s24, 1
      %p105 = por %p103, %p104
      %p106 = scmp.ne.s32.totalorder %s97, %s98
      %p107 = scmp.eq.s32.totalorder %s24, 0
      %p108 = por %p106, %p107
      %p109 = scmp.ne.s32.totalorder %s97, %s98
      %p110 = scmp.eq.s32.totalorder %s25, 1
      %p111 = por %p109, %p110
      %p113 = scmp.ne.s32.totalorder %s98, %s112
      %p114 = scmp.eq.s32.totalorder %s25, 0
      %p115 = por %p113, %p114
      %s117 = sadd.s32 %s116, 1
      %p120 = scmp.eq.s32.totalorder %s19, 1
      %p121 = scmp.ne.s32.totalorder %s116, %s118
      %p122 = scmp.eq.s32.totalorder %s19, 0
      %p123 = por %p121, %p122
      %p124 = scmp.ne.s32.totalorder %s116, %s118
      %p125 = scmp.eq.s32.totalorder %s24, 1
      %p126 = por %p124, %p125
      %p127 = scmp.ne.s32.totalorder %s118, %s119
      %p128 = scmp.eq.s32.totalorder %s24, 0
      %p129 = por %p127, %p128
      %p130 = scmp.ne.s32.totalorder %s118, %s119
      %p131 = scmp.eq.s32.totalorder %s25, 1
      %p132 = por %p130, %p131
      %p134 = scmp.ne.s32.totalorder %s119, %s133
      %p135 = scmp.eq.s32.totalorder %s25, 0
      %p136 = por %p134, %p135
      %s138 = sadd.s32 %s137, 1
      %p141 = scmp.eq.s32.totalorder %s19, 1
      %p142 = scmp.ne.s32.totalorder %s137, %s139
      %p143 = scmp.eq.s32.totalorder %s19, 0
      %p144 = por %p142, %p143
      %p145 = scmp.ne.s32.totalorder %s137, %s139
      %p146 = scmp.eq.s32.totalorder %s24, 1
      %p147 = por %p145, %p146
      %p148 = scmp.ne.s32.totalorder %s139, %s140
      %p149 = scmp.eq.s32.totalorder %s24, 0
      %p150 = por %p148, %p149
      %p151 = scmp.ne.s32.totalorder %s139, %s140
      %p152 = scmp.eq.s32.totalorder %s25, 1
      %p153 = por %p151, %p152
      %p155 = scmp.ne.s32.totalorder %s140, %s154
      %p156 = scmp.eq.s32.totalorder %s25, 0
      %p157 = por %p155, %p156
      %s158 = ssub.s32 %s19, %s26
      %p159 = scmp.eq.s32.totalorder %s158, 0
      %s161 = sadd.s32 %s160, 1
      %s162 = scalar_select %p159, %s160, %s161
      %p165 = pneg %p159
      %p166 = scmp.eq.s32.totalorder %s19, 1
      %p167 = por %p165, %p166
      %p168 = scmp.ne.s32.totalorder %s160, %s163
      %p169 = scmp.eq.s32.totalorder %s19, 0
      %p170 = por %p168, %p169
      %p171 = scmp.ne.s32.totalorder %s160, %s163
      %p172 = scmp.eq.s32.totalorder %s24, 1
      %p173 = por %p171, %p172
      %p174 = scmp.ne.s32.totalorder %s163, %s164
      %p175 = scmp.eq.s32.totalorder %s24, 0
      %p176 = por %p174, %p175
      %p177 = scmp.ne.s32.totalorder %s163, %s164
      %p178 = scmp.eq.s32.totalorder %s25, 1
      %p179 = por %p177, %p178
      %p181 = scmp.ne.s32.totalorder %s164, %s180
      %p182 = scmp.eq.s32.totalorder %s25, 0
      %p183 = por %p181, %p182
      %p184 = scmp.le.s32.totalorder 1, %s19
      %p185 = scmp.lt.s32.totalorder %s19, 3
      %p186 = pnand %p184, %p185
      %p187 = pneg %p186
      // Predicated region
      $region9: #{tpu_custom_call.1} parent=5 // pred_check
        _
      $region10: #{tpu_custom_call.1} parent=5 // pred_check_branch
        %189 = sbr.rel (%p186) target = $region12
      $region11: #{tpu_custom_call.1} parent=5 // pred_region
        %s190 = ssub.s32 %s19, 1
        // Predicated region
        $region13: #{tpu_custom_call.1} parent=11 // pred_check
          %p191 = pneg %p66
        $region14: #{tpu_custom_call.1} parent=11 // pred_check_branch
          %193 = sbr.rel (%p191) target = $region16
        $region15: #{tpu_custom_call.1} parent=11 // pred_region
          %s195 = ssub.s32 2048, 2048
          %196 = vsyncadd [#allocation6], %s195
          %s197 = sshll.u32 [#allocation5], 4
          %s198 = int_to_ptr.vmem [resolvable:$true] %s197
          %203 = dma.hbm_to_vmem [thread:$0]  %s1, 2048, %s198, [#allocation6], 128, 128, 8
        $region16: #{tpu_custom_call.1} parent=11 // pred_fallthru
          _
        // Predicated region
        $region17: #{tpu_custom_call.1} parent=11 // pred_check
          %p204 = pneg %p87
        $region18: #{tpu_custom_call.1} parent=11 // pred_check_branch
          %206 = sbr.rel (%p204) target = $region20
        $region19: #{tpu_custom_call.1} parent=11 // pred_region
          _
        $region20: #{tpu_custom_call.1} parent=11 // pred_fallthru
          _
        // Predicated region
        $region21: #{tpu_custom_call.1} parent=11 // pred_check
          %p207 = pneg %p108
        $region22: #{tpu_custom_call.1} parent=11 // pred_check_branch
          %209 = sbr.rel (%p207) target = $region24
        $region23: #{tpu_custom_call.1} parent=11 // pred_region
          _
        $region24: #{tpu_custom_call.1} parent=11 // pred_fallthru
          _
        // Predicated region
        $region25: #{tpu_custom_call.1} parent=11 // pred_check
          %p210 = pneg %p129
        $region26: #{tpu_custom_call.1} parent=11 // pred_check_branch
          %212 = sbr.rel (%p210) target = $region28
        $region27: #{tpu_custom_call.1} parent=11 // pred_region
          %s214 = ssub.s32 2048, 2048
          %215 = vsyncadd [#allocation6], %s214
          %s216 = sshll.u32 [#allocation7], 4
          %s217 = int_to_ptr.vmem [resolvable:$true] %s216
          %222 = dma.hbm_to_vmem [thread:$0]  %s4, 2048, %s217, [#allocation6], 128, 128, 8
        $region28: #{tpu_custom_call.1} parent=11 // pred_fallthru
          _
        // Predicated region
        $region29: #{tpu_custom_call.1} parent=11 // pred_check
          %p223 = pneg %p150
        $region30: #{tpu_custom_call.1} parent=11 // pred_check_branch
          %225 = sbr.rel (%p223) target = $region32
        $region31: #{tpu_custom_call.1} parent=11 // pred_region
          _
        $region32: #{tpu_custom_call.1} parent=11 // pred_fallthru
          _
      $region12: #{tpu_custom_call.1} parent=5 // pred_fallthru
        _
      %p226 = scmp.lt.s32.totalorder %s19, 2
      // Predicated region
      $region33: #{tpu_custom_call.1} parent=5 // pred_check
        %p227 = pneg %p226
      $region34: #{tpu_custom_call.1} parent=5 // pred_check_branch
        %229 = sbr.rel (%p227) target = $region36
      $region35: #{tpu_custom_call.1} parent=5 // pred_region
        // Predicated region
        $region37: #{tpu_custom_call.1} parent=35 // pred_check
          %p230 = pneg %p39
        $region38: #{tpu_custom_call.1} parent=35 // pred_check_branch
          %232 = sbr.rel (%p230) target = $region40
        $region39: #{tpu_custom_call.1} parent=35 // pred_region
          %s233 = sand.u32 %s29, 1
          %s234 = scalar_lea.sflag [#allocation3], %s233
          %s235 = sand.u32 %s29, 1
          %s236 = smul.addr %s235, 8
          %s237 = scalar_lea.vmem [#allocation2], %s236
          %s239 = ssub.s32 128, 128
          %240 = vsyncadd %s234, %s239
          %s241 = smul.addr %s19, 128
          %s242 = scalar_lea.hbm %s0, %s241
          %s244 = sshll.u32 %s237, 4
          %s245 = int_to_ptr.vmem [resolvable:$true] %s244
          %247 = dma.hbm_to_vmem [thread:$0]  %s242, 128, %s245, %s234
        $region40: #{tpu_custom_call.1} parent=35 // pred_fallthru
          _
      $region36: #{tpu_custom_call.1} parent=5 // pred_fallthru
        _
      %p248 = scmp.le.s32.totalorder 1, %s19
      %p249 = scmp.lt.s32.totalorder %s19, 3
      %p250 = pnand %p248, %p249
      %p251 = pneg %p250
      // Predicated region
      $region41: #{tpu_custom_call.1} parent=5 // pred_check
        _
      $region42: #{tpu_custom_call.1} parent=5 // pred_check_branch
        %253 = sbr.rel (%p250) target = $region44
      $region43: #{tpu_custom_call.1} parent=5 // pred_region
        %s254 = ssub.s32 %s19, 1
        %s255 = sand.u32 %s32, 1
        %s256 = scalar_lea.sflag [#allocation3], %s255
        %s257 = sand.u32 %s32, 1
        %s258 = smul.addr %s257, 8
        %s259 = scalar_lea.vmem [#allocation2], %s258
        // Predicated region
        $region45: #{tpu_custom_call.1} parent=43 // pred_check
          %p260 = pneg %p45
        $region46: #{tpu_custom_call.1} parent=43 // pred_check_branch
          %262 = sbr.rel (%p260) target = $region48
        $region47: #{tpu_custom_call.1} parent=43 // pred_region
          %263 = dma.done %s256, 128
        $region48: #{tpu_custom_call.1} parent=43 // pred_fallthru
          _
        // Predicated region
        $region49: #{tpu_custom_call.1} parent=43 // pred_check
          %p264 = pneg %p66
        $region50: #{tpu_custom_call.1} parent=43 // pred_check_branch
          %266 = sbr.rel (%p264) target = $region52
        $region51: #{tpu_custom_call.1} parent=43 // pred_region
          %267 = dma.done [#allocation6], 2048
        $region52: #{tpu_custom_call.1} parent=43 // pred_fallthru
          _
        // Predicated region
        $region53: #{tpu_custom_call.1} parent=43 // pred_check
          %p268 = pneg %p129
        $region54: #{tpu_custom_call.1} parent=43 // pred_check_branch
          %270 = sbr.rel (%p268) target = $region56
        $region55: #{tpu_custom_call.1} parent=43 // pred_region
          %271 = dma.done [#allocation6], 2048
        $region56: #{tpu_custom_call.1} parent=43 // pred_fallthru
          _
        %s272 = sand.u32 %s32, 1
        %s273 = scalar_lea.sflag [#allocation3], %s272
        %s274 = sand.u32 %s32, 1
        %s275 = smul.addr %s274, 8
        %s276 = scalar_lea.vmem [#allocation2], %s275
        %p277 = pneg %p45
        %p278 = pneg %p42
        %p279 = pneg %p66
        %p280 = pneg %p63
        %p281 = pneg %p87
        %p282 = pneg %p84
        %p283 = pneg %p108
        %p284 = pneg %p105
        %p285 = pneg %p129
        %p286 = pneg %p126
        %p287 = pneg %p150
        %p288 = pneg %p147
        %p289 = pneg %p176
        %p290 = pneg %p173
        %s291 = sand.u32 %s163, 1
        %s292 = scalar_lea.sflag [#allocation4], %s291
        %s293 = sand.u32 %s163, 1
        %s294 = smul.addr %s293, 8
        %s295 = scalar_lea.vmem [#allocation8], %s294
        %v296 = vld [vmem:[%s259] sm:$0xff]
        %v297 = vld [vmem:[#allocation5] sm:$0xff]
        %v298 = vld [vmem:[#allocation5 + $0x8] sm:$0xff]
        %v299 = vld [vmem:[#allocation5 + $0x10] sm:$0xff]
        %v300 = vld [vmem:[#allocation5 + $0x18] sm:$0xff]
        %v301 = vld [vmem:[#allocation5 + $0x20] sm:$0xff]
        %v302 = vld [vmem:[#allocation5 + $0x28] sm:$0xff]
        %v303 = vld [vmem:[#allocation5 + $0x30] sm:$0xff]
        %v304 = vld [vmem:[#allocation5 + $0x38] sm:$0xff]
        %v305 = vld [vmem:[#allocation5 + $0x40] sm:$0xff]
        %v306 = vld [vmem:[#allocation5 + $0x48] sm:$0xff]
        %v307 = vld [vmem:[#allocation5 + $0x50] sm:$0xff]
        %v308 = vld [vmem:[#allocation5 + $0x58] sm:$0xff]
        %v309 = vld [vmem:[#allocation5 + $0x60] sm:$0xff]
        %v310 = vld [vmem:[#allocation5 + $0x68] sm:$0xff]
        %v311 = vld [vmem:[#allocation5 + $0x70] sm:$0xff]
        %v312 = vld [vmem:[#allocation5 + $0x78] sm:$0xff]
        %313 = vmatprep.subr.mxu0 0.0
        %314 = vmatpush1.msra.mxu0 %v312
        %315 = vmatprep.subr.mxu0 0.0
        %316 = vmatpush1.msra.mxu0 %v311
        %317 = vmatprep.subr.mxu0 0.0
        %318 = vmatpush1.msra.mxu0 %v310
        %319 = vmatprep.subr.mxu0 0.0
        %320 = vmatpush1.msra.mxu0 %v309
        %321 = vmatprep.subr.mxu0 0.0
        %322 = vmatpush1.msra.mxu0 %v308
        %323 = vmatprep.subr.mxu0 0.0
        %324 = vmatpush1.msra.mxu0 %v307
        %325 = vmatprep.subr.mxu0 0.0
        %326 = vmatpush1.msra.mxu0 %v306
        %327 = vmatprep.subr.mxu0 0.0
        %328 = vmatpush1.msra.mxu0 %v305
        %329 = vmatprep.subr.mxu0 0.0
        %330 = vmatpush1.msra.mxu0 %v304
        %331 = vmatprep.subr.mxu0 0.0
        %332 = vmatpush1.msra.mxu0 %v303
        %333 = vmatprep.subr.mxu0 0.0
        %334 = vmatpush1.msra.mxu0 %v302
        %335 = vmatprep.subr.mxu0 0.0
        %336 = vmatpush1.msra.mxu0 %v301
        %337 = vmatprep.subr.mxu0 0.0
        %338 = vmatpush1.msra.mxu0 %v300
        %339 = vmatprep.subr.mxu0 0.0
        %340 = vmatpush1.msra.mxu0 %v299
        %341 = vmatprep.subr.mxu0 0.0
        %342 = vmatpush1.msra.mxu0 %v298
        %343 = vmatprep.subr.mxu0 0.0
        %344 = vmatpush1.msra.mxu0 %v297
        %345 = vmatprep.subr.mxu0 0.0
        %346 = vmatpush2.msra.mxu0 0.0
        %347 = vmatprep.subr.mxu0 0.0
        %348 = vmatpush2.msra.mxu0 0.0
        %349 = vmatprep.subr.mxu0 0.0
        %350 = vmatpush2.msra.mxu0 0.0
        %351 = vmatprep.subr.mxu0 0.0
        %352 = vmatpush2.msra.mxu0 0.0
        %353 = vmatprep.subr.mxu0 0.0
        %354 = vmatpush2.msra.mxu0 0.0
        %355 = vmatprep.subr.mxu0 0.0
        %356 = vmatpush2.msra.mxu0 0.0
        %357 = vmatprep.subr.mxu0 0.0
        %358 = vmatpush2.msra.mxu0 0.0
        %359 = vmatprep.subr.mxu0 0.0
        %360 = vmatpush2.msra.mxu0 0.0
        %361 = vmatprep.subr.mxu0 0.0
        %362 = vmatpush2.msra.mxu0 0.0
        %363 = vmatprep.subr.mxu0 0.0
        %364 = vmatpush2.msra.mxu0 0.0
        %365 = vmatprep.subr.mxu0 0.0
        %366 = vmatpush2.msra.mxu0 0.0
        %367 = vmatprep.subr.mxu0 0.0
        %368 = vmatpush2.msra.mxu0 0.0
        %369 = vmatprep.subr.mxu0 0.0
        %370 = vmatpush2.msra.mxu0 0.0
        %371 = vmatprep.subr.mxu0 0.0
        %372 = vmatpush2.msra.mxu0 0.0
        %373 = vmatprep.subr.mxu0 0.0
        %374 = vmatpush2.msra.mxu0 0.0
        %375 = vmatprep.subr.mxu0 0.0
        %376 = vmatpush2.msra.mxu0 0.0
        %377 = vmatprep.mubr.f32.mxu0 0.0
        %378 = vmatmul.mubr.f32.gmra.mxu0 %v296
        %v379 = vpop.f32.mrf.mxu0
        %v380 = vadd.f32 0.0, %v379
        %v381 = vpop.f32.mrf.mxu0
        %382 = vdwg.mxu0
        %v383 = vld [vmem:[%s2] sm:$0x1]
        %v385 = vlaneseq
        %v386 = vshrl.u32 %v385, 7
        %v387 = vsub.s32 0, %v386
        %v388 = vrot.slane %v383, %v387
        %v390 = vmul.f32 %v380, %v388
        %v391 = vld [vmem:[%s3] sm:$0x1]
        %v393 = vlaneseq
        %v394 = vshrl.u32 %v393, 7
        %v395 = vsub.s32 0, %v394
        %v396 = vrot.slane %v391, %v395
        %v398 = vadd.f32 %v390, %v396
        %v399 = vmax.f32 %v398, 0.0
        %v400 = vld [vmem:[#allocation7] sm:$0xff]
        %v401 = vld [vmem:[#allocation7 + $0x8] sm:$0xff]
        %v402 = vld [vmem:[#allocation7 + $0x10] sm:$0xff]
        %v403 = vld [vmem:[#allocation7 + $0x18] sm:$0xff]
        %v404 = vld [vmem:[#allocation7 + $0x20] sm:$0xff]
        %v405 = vld [vmem:[#allocation7 + $0x28] sm:$0xff]
        %v406 = vld [vmem:[#allocation7 + $0x30] sm:$0xff]
        %v407 = vld [vmem:[#allocation7 + $0x38] sm:$0xff]
        %v408 = vld [vmem:[#allocation7 + $0x40] sm:$0xff]
        %v409 = vld [vmem:[#allocation7 + $0x48] sm:$0xff]
        %v410 = vld [vmem:[#allocation7 + $0x50] sm:$0xff]
        %v411 = vld [vmem:[#allocation7 + $0x58] sm:$0xff]
        %v412 = vld [vmem:[#allocation7 + $0x60] sm:$0xff]
        %v413 = vld [vmem:[#allocation7 + $0x68] sm:$0xff]
        %v414 = vld [vmem:[#allocation7 + $0x70] sm:$0xff]
        %v415 = vld [vmem:[#allocation7 + $0x78] sm:$0xff]
        %v416 = vld [vmem:[%s5] sm:$0x1]
        %v418 = vlaneseq
        %v419 = vshrl.u32 %v418, 7
        %v420 = vsub.s32 0, %v419
        %v421 = vrot.slane %v416, %v420
        %423 = vmatprep.subr.mxu0 0.0
        %424 = vmatpush1.msra.mxu0 %v415
        %425 = vmatprep.subr.mxu0 0.0
        %426 = vmatpush1.msra.mxu0 %v414
        %427 = vmatprep.subr.mxu0 0.0
        %428 = vmatpush1.msra.mxu0 %v413
        %429 = vmatprep.subr.mxu0 0.0
        %430 = vmatpush1.msra.mxu0 %v412
        %431 = vmatprep.subr.mxu0 0.0
        %432 = vmatpush1.msra.mxu0 %v411
        %433 = vmatprep.subr.mxu0 0.0
        %434 = vmatpush1.msra.mxu0 %v410
        %435 = vmatprep.subr.mxu0 0.0
        %436 = vmatpush1.msra.mxu0 %v409
        %437 = vmatprep.subr.mxu0 0.0
        %438 = vmatpush1.msra.mxu0 %v408
        %439 = vmatprep.subr.mxu0 0.0
        %440 = vmatpush1.msra.mxu0 %v407
        %441 = vmatprep.subr.mxu0 0.0
        %442 = vmatpush1.msra.mxu0 %v406
        %443 = vmatprep.subr.mxu0 0.0
        %444 = vmatpush1.msra.mxu0 %v405
        %445 = vmatprep.subr.mxu0 0.0
        %446 = vmatpush1.msra.mxu0 %v404
        %447 = vmatprep.subr.mxu0 0.0
        %448 = vmatpush1.msra.mxu0 %v403
        %449 = vmatprep.subr.mxu0 0.0
        %450 = vmatpush1.msra.mxu0 %v402
        %451 = vmatprep.subr.mxu0 0.0
        %452 = vmatpush1.msra.mxu0 %v401
        %453 = vmatprep.subr.mxu0 0.0
        %454 = vmatpush1.msra.mxu0 %v400
        %455 = vmatprep.subr.mxu0 0.0
        %456 = vmatpush2.msra.mxu0 0.0
        %457 = vmatprep.subr.mxu0 0.0
        %458 = vmatpush2.msra.mxu0 0.0
        %459 = vmatprep.subr.mxu0 0.0
        %460 = vmatpush2.msra.mxu0 0.0
        %461 = vmatprep.subr.mxu0 0.0
        %462 = vmatpush2.msra.mxu0 0.0
        %463 = vmatprep.subr.mxu0 0.0
        %464 = vmatpush2.msra.mxu0 0.0
        %465 = vmatprep.subr.mxu0 0.0
        %466 = vmatpush2.msra.mxu0 0.0
        %467 = vmatprep.subr.mxu0 0.0
        %468 = vmatpush2.msra.mxu0 0.0
        %469 = vmatprep.subr.mxu0 0.0
        %470 = vmatpush2.msra.mxu0 0.0
        %471 = vmatprep.subr.mxu0 0.0
        %472 = vmatpush2.msra.mxu0 0.0
        %473 = vmatprep.subr.mxu0 0.0
        %474 = vmatpush2.msra.mxu0 0.0
        %475 = vmatprep.subr.mxu0 0.0
        %476 = vmatpush2.msra.mxu0 0.0
        %477 = vmatprep.subr.mxu0 0.0
        %478 = vmatpush2.msra.mxu0 0.0
        %479 = vmatprep.subr.mxu0 0.0
        %480 = vmatpush2.msra.mxu0 0.0
        %481 = vmatprep.subr.mxu0 0.0
        %482 = vmatpush2.msra.mxu0 0.0
        %483 = vmatprep.subr.mxu0 0.0
        %484 = vmatpush2.msra.mxu0 0.0
        %485 = vmatprep.subr.mxu0 0.0
        %486 = vmatpush2.msra.mxu0 0.0
        %487 = vmatprep.mubr.f32.mxu0 0.0
        %488 = vmatmul.mubr.f32.gmra.mxu0 %v399
        %v489 = vpop.f32.mrf.mxu0
        %v490 = vadd.f32 %v421, %v489
        %v491 = vpop.f32.mrf.mxu0
        %492 = vdwg.mxu0
        %493 = vst [vmem:[%s295] sm:$0xff] %v490
        %s494 = sand.u32 %s163, 1
        %s495 = scalar_lea.sflag [#allocation4], %s494
        %s496 = sand.u32 %s163, 1
        %s497 = smul.addr %s496, 8
        %s498 = scalar_lea.vmem [#allocation8], %s497
        // Predicated region
        $region57: #{tpu_custom_call.1} parent=43 // pred_check
          %p499 = pneg %p173
        $region58: #{tpu_custom_call.1} parent=43 // pred_check_branch
          %501 = sbr.rel (%p499) target = $region60
        $region59: #{tpu_custom_call.1} parent=43 // pred_region
          %s503 = ssub.s32 128, 128
          %504 = vsyncadd %s495, %s503
          %s505 = smul.addr %s24, 128
          %s506 = scalar_lea.hbm %s6, %s505
          %s508 = sshll.u32 %s498, 4
          %s509 = int_to_ptr.vmem [resolvable:$true] %s508
          %511 = dma.vmem_to_hbm [thread:$0]  %s509, 128, %s506, %s495
        $region60: #{tpu_custom_call.1} parent=43 // pred_fallthru
          _
      $region44: #{tpu_custom_call.1} parent=5 // pred_fallthru
        _
      %p512 = scmp.le.s32.totalorder 2, %s19
      // Predicated region
      $region61: #{tpu_custom_call.1} parent=5 // pred_check
        %p513 = pneg %p512
      $region62: #{tpu_custom_call.1} parent=5 // pred_check_branch
        %515 = sbr.rel (%p513) target = $region64
      $region63: #{tpu_custom_call.1} parent=5 // pred_region
        %s516 = ssub.s32 %s19, 2
        // Predicated region
        $region65: #{tpu_custom_call.1} parent=63 // pred_check
          %p517 = pneg %p179
        $region66: #{tpu_custom_call.1} parent=63 // pred_check_branch
          %519 = sbr.rel (%p517) target = $region68
        $region67: #{tpu_custom_call.1} parent=63 // pred_region
          %s520 = sand.u32 %s164, 1
          %s521 = scalar_lea.sflag [#allocation4], %s520
          %s522 = sand.u32 %s164, 1
          %s523 = smul.addr %s522, 8
          %s524 = scalar_lea.vmem [#allocation8], %s523
          %525 = dma.done %s521, 128
        $region68: #{tpu_custom_call.1} parent=63 // pred_fallthru
          _
      $region64: #{tpu_custom_call.1} parent=5 // pred_fallthru
        _
    $region6: #{tpu_custom_call.1} parent=1 // loop_footer
      %s23 = sadd.s32 1, %s19
    $region7: #{tpu_custom_call.1} parent=1 // loop_footer_branch
      %18 = sbr.rel target = $region3
    $region8: #{tpu_custom_call.1} parent=1 // loop_exit
      _
    %526 = vsyncpa [#allocation3], 1
    %s527 = scalar_lea.sflag [#allocation3], 1
    %528 = vsyncpa %s527, 1
    %529 = vsyncpa [#allocation6], 1
    %530 = vsyncpa [#allocation4], 1
    %s531 = scalar_lea.sflag [#allocation4], 1
    %532 = vsyncpa %s531, 1

// kernel: tpu_custom_call.1
$region0: #{tpu_custom_call.1}
  #allocation0 [shape = 'u32[]', space=smem, size = 0x4, offset = 0x4, fixed_abs, tag = 'smem constant byte address 0x4 - core index']
  #allocation1 [shape = 'u32[144,128]{1,0:T(1,128)}', space=vmem, size = 0x12000, scoped, tag = 'internal scratch']
  %s0 = inlined_call_operand.hbm [shape: f32[16,128], index: 0, kind: input, shape index: {}]
  %s1 = inlined_call_operand.hbm [shape: f32[128,128], index: 1, kind: input, shape index: {}]
  %s2 = inlined_call_operand.vmem [shape: f32[1,128], index: 2, kind: input, shape index: {}]
  %s3 = inlined_call_operand.vmem [shape: f32[1,128], index: 3, kind: input, shape index: {}]
  %s4 = inlined_call_operand.hbm [shape: f32[128,128], index: 4, kind: input, shape index: {}]
  %s5 = inlined_call_operand.vmem [shape: f32[1,128], index: 5, kind: input, shape index: {}]
  %s6 = inlined_call_operand.hbm [shape: f32[16,128], index: 6, kind: output, shape index: {}]
  %s7 = sld [smem:[#allocation0]]
  $region69: #{tpu_custom_call.1} parent=0
    _
  %s9 = ssub.s32 1, %s7
  %s10 = scalar_select 0, %s9, %s7
  $region1: #{tpu_custom_call.1} parent=0
    #allocation2 [shape = 'u8[8192]{0}', space=vmem, size = 0x2000, scoped, tag = 'input window, operand 0']
    #allocation3 [shape = 's32[2]{0}', space=sflag, size = 0x8, scoped, tag = 'scoped memory for tpu_custom_call.1']
    #allocation4 [shape = 's32[2]{0}', space=sflag, size = 0x8, scoped, tag = 'scoped memory for tpu_custom_call.1']
    #allocation5 [shape = 'u8[65536]{0}', space=vmem, size = 0x10000, scoped, tag = 'input window, operand 1, single buffered']
    #allocation6 [shape = 's32[1]{0}', space=sflag, size = 0x4, scoped, tag = 'scoped memory for tpu_custom_call.1']
    #allocation7 [shape = 'u8[65536]{0}', space=vmem, size = 0x10000, scoped, tag = 'input window, operand 4, single buffered']
    #allocation8 [shape = 'u8[8192]{0}', space=vmem, size = 0x2000, scoped, tag = 'output window, operand 0']
    %11 = vsyncpa [#allocation3], 0
    %s12 = scalar_lea.sflag [#allocation3], 1
    %13 = vsyncpa %s12, 0
    %14 = vsyncpa [#allocation6], 0
    %15 = vsyncpa [#allocation4], 0
    %s16 = scalar_lea.sflag [#allocation4], 1
    %17 = vsyncpa %s16, 0
    loop: start=0, step=1, limit=4
    $region2: #{tpu_custom_call.1} parent=1 // loop_pre_header
      _
    $region3: #{tpu_custom_call.1} parent=1 // loop_header
      %s19 = sphi 0, %s23
      %p20 = scmp.ge.s32.totalorder %s19, 4
      %s29 = sphi 0, %s31
      %s32 = sphi 0, %s29
      %s33 = sphi 0, %s32
      %s49 = sphi 0, %s33
      %s53 = sphi 0, %s53
      %s55 = sphi 0, %s53
      %s56 = sphi 0, %s55
      %s70 = sphi 0, %s56
      %s74 = sphi 0, %s74
      %s76 = sphi 0, %s74
      %s77 = sphi 0, %s76
      %s91 = sphi 0, %s77
      %s95 = sphi 0, %s95
      %s97 = sphi 0, %s95
      %s98 = sphi 0, %s97
      %s112 = sphi 0, %s98
      %s116 = sphi 0, %s116
      %s118 = sphi 0, %s116
      %s119 = sphi 0, %s118
      %s133 = sphi 0, %s119
      %s137 = sphi 0, %s137
      %s139 = sphi 0, %s137
      %s140 = sphi 0, %s139
      %s154 = sphi 0, %s140
      %s160 = sphi 0, %s162
      %s163 = sphi 0, %s160
      %s164 = sphi 0, %s163
      %s180 = sphi 0, %s164
    $region4: #{tpu_custom_call.1} parent=1 // loop_header_branch
      %22 = sbr.rel (%p20) target = $region8
    $region5: #{tpu_custom_call.1} parent=1 // loop_body
      %s24 = ssub.s32 %s19, 1
      %s25 = ssub.s32 %s19, 2
      %s26 = sadd.s32 %s19, 1
      %s27 = ssub.s32 %s19, %s26
      %p28 = scmp.eq.s32.totalorder %s27, 0
      %s30 = sadd.s32 %s29, 1
      %s31 = scalar_select %p28, %s29, %s30
      %p34 = pneg %p28
      %p35 = scmp.eq.s32.totalorder %s19, 1
      %p36 = por %p34, %p35
      %p37 = scmp.ne.s32.totalorder %s29, %s32
      %p38 = scmp.eq.s32.totalorder %s19, 0
      %p39 = por %p37, %p38
      %p40 = scmp.ne.s32.totalorder %s29, %s32
      %p41 = scmp.eq.s32.totalorder %s24, 1
      %p42 = por %p40, %p41
      %p43 = scmp.ne.s32.totalorder %s32, %s33
      %p44 = scmp.eq.s32.totalorder %s24, 0
      %p45 = por %p43, %p44
      %p46 = scmp.ne.s32.totalorder %s32, %s33
      %p47 = scmp.eq.s32.totalorder %s25, 1
      %p48 = por %p46, %p47
      %p50 = scmp.ne.s32.totalorder %s33, %s49
      %p51 = scmp.eq.s32.totalorder %s25, 0
      %p52 = por %p50, %p51
      %s54 = sadd.s32 %s53, 1
      %p57 = scmp.eq.s32.totalorder %s19, 1
      %p58 = scmp.ne.s32.totalorder %s53, %s55
      %p59 = scmp.eq.s32.totalorder %s19, 0
      %p60 = por %p58, %p59
      %p61 = scmp.ne.s32.totalorder %s53, %s55
      %p62 = scmp.eq.s32.totalorder %s24, 1
      %p63 = por %p61, %p62
      %p64 = scmp.ne.s32.totalorder %s55, %s56
      %p65 = scmp.eq.s32.totalorder %s24, 0
      %p66 = por %p64, %p65
      %p67 = scmp.ne.s32.totalorder %s55, %s56
      %p68 = scmp.eq.s32.totalorder %s25, 1
      %p69 = por %p67, %p68
      %p71 = scmp.ne.s32.totalorder %s56, %s70
      %p72 = scmp.eq.s32.totalorder %s25, 0
      %p73 = por %p71, %p72
      %s75 = sadd.s32 %s74, 1
      %p78 = scmp.eq.s32.totalorder %s19, 1
      %p79 = scmp.ne.s32.totalorder %s74, %s76
      %p80 = scmp.eq.s32.totalorder %s19, 0
      %p81 = por %p79, %p80
      %p82 = scmp.ne.s32.totalorder %s74, %s76
      %p83 = scmp.eq.s32.totalorder %s24, 1
      %p84 = por %p82, %p83
      %p85 = scmp.ne.s32.totalorder %s76, %s77
      %p86 = scmp.eq.s32.totalorder %s24, 0
      %p87 = por %p85, %p86
      %p88 = scmp.ne.s32.totalorder %s76, %s77
      %p89 = scmp.eq.s32.totalorder %s25, 1
      %p90 = por %p88, %p89
      %p92 = scmp.ne.s32.totalorder %s77, %s91
      %p93 = scmp.eq.s32.totalorder %s25, 0
      %p94 = por %p92, %p93
      %s96 = sadd.s32 %s95, 1
      %p99 = scmp.eq.s32.totalorder %s19, 1
      %p100 = scmp.ne.s32.totalorder %s95, %s97
      %p101 = scmp.eq.s32.totalorder %s19, 0
      %p102 = por %p100, %p101
      %p103 = scmp.ne.s32.totalorder %s95, %s97
      %p104 = scmp.eq.s32.totalorder %s24, 1
      %p105 = por %p103, %p104
      %p106 = scmp.ne.s32.totalorder %s97, %s98
      %p107 = scmp.eq.s32.totalorder %s24, 0
      %p108 = por %p106, %p107
      %p109 = scmp.ne.s32.totalorder %s97, %s98
      %p110 = scmp.eq.s32.totalorder %s25, 1
      %p111 = por %p109, %p110
      %p113 = scmp.ne.s32.totalorder %s98, %s112
      %p114 = scmp.eq.s32.totalorder %s25, 0
      %p115 = por %p113, %p114
      %s117 = sadd.s32 %s116, 1
      %p120 = scmp.eq.s32.totalorder %s19, 1
      %p121 = scmp.ne.s32.totalorder %s116, %s118
      %p122 = scmp.eq.s32.totalorder %s19, 0
      %p123 = por %p121, %p122
      %p124 = scmp.ne.s32.totalorder %s116, %s118
      %p125 = scmp.eq.s32.totalorder %s24, 1
      %p126 = por %p124, %p125
      %p127 = scmp.ne.s32.totalorder %s118, %s119
      %p128 = scmp.eq.s32.totalorder %s24, 0
      %p129 = por %p127, %p128
      %p130 = scmp.ne.s32.totalorder %s118, %s119
      %p131 = scmp.eq.s32.totalorder %s25, 1
      %p132 = por %p130, %p131
      %p134 = scmp.ne.s32.totalorder %s119, %s133
      %p135 = scmp.eq.s32.totalorder %s25, 0
      %p136 = por %p134, %p135
      %s138 = sadd.s32 %s137, 1
      %p141 = scmp.eq.s32.totalorder %s19, 1
      %p142 = scmp.ne.s32.totalorder %s137, %s139
      %p143 = scmp.eq.s32.totalorder %s19, 0
      %p144 = por %p142, %p143
      %p145 = scmp.ne.s32.totalorder %s137, %s139
      %p146 = scmp.eq.s32.totalorder %s24, 1
      %p147 = por %p145, %p146
      %p148 = scmp.ne.s32.totalorder %s139, %s140
      %p149 = scmp.eq.s32.totalorder %s24, 0
      %p150 = por %p148, %p149
      %p151 = scmp.ne.s32.totalorder %s139, %s140
      %p152 = scmp.eq.s32.totalorder %s25, 1
      %p153 = por %p151, %p152
      %p155 = scmp.ne.s32.totalorder %s140, %s154
      %p156 = scmp.eq.s32.totalorder %s25, 0
      %p157 = por %p155, %p156
      %s158 = ssub.s32 %s19, %s26
      %p159 = scmp.eq.s32.totalorder %s158, 0
      %s161 = sadd.s32 %s160, 1
      %s162 = scalar_select %p159, %s160, %s161
      %p165 = pneg %p159
      %p166 = scmp.eq.s32.totalorder %s19, 1
      %p167 = por %p165, %p166
      %p168 = scmp.ne.s32.totalorder %s160, %s163
      %p169 = scmp.eq.s32.totalorder %s19, 0
      %p170 = por %p168, %p169
      %p171 = scmp.ne.s32.totalorder %s160, %s163
      %p172 = scmp.eq.s32.totalorder %s24, 1
      %p173 = por %p171, %p172
      %p174 = scmp.ne.s32.totalorder %s163, %s164
      %p175 = scmp.eq.s32.totalorder %s24, 0
      %p176 = por %p174, %p175
      %p177 = scmp.ne.s32.totalorder %s163, %s164
      %p178 = scmp.eq.s32.totalorder %s25, 1
      %p179 = por %p177, %p178
      %p181 = scmp.ne.s32.totalorder %s164, %s180
      %p182 = scmp.eq.s32.totalorder %s25, 0
      %p183 = por %p181, %p182
      %p184 = scmp.le.s32.totalorder 1, %s19
      %p185 = scmp.lt.s32.totalorder %s19, 3
      %p186 = pnand %p184, %p185
      %p187 = pneg %p186
      // Predicated region
      $region9: #{tpu_custom_call.1} parent=5 // pred_check
        _
      $region10: #{tpu_custom_call.1} parent=5 // pred_check_branch
        %189 = sbr.rel (%p186) target = $region12
      $region11: #{tpu_custom_call.1} parent=5 // pred_region
        %s190 = ssub.s32 %s19, 1
        // Predicated region
        $region13: #{tpu_custom_call.1} parent=11 // pred_check
          %p191 = pneg %p66
        $region14: #{tpu_custom_call.1} parent=11 // pred_check_branch
          %193 = sbr.rel (%p191) target = $region16
        $region15: #{tpu_custom_call.1} parent=11 // pred_region
          %s195 = ssub.s32 2048, 2048
          %196 = vsyncadd [#allocation6], %s195
          %s197 = sshll.u32 [#allocation5], 4
          %s198 = int_to_ptr.vmem [resolvable:$true] %s197
          %203 = dma.hbm_to_vmem [thread:$0]  %s1, 2048, %s198, [#allocation6], 128, 128, 8
        $region16: #{tpu_custom_call.1} parent=11 // pred_fallthru
          _
        // Predicated region
        $region17: #{tpu_custom_call.1} parent=11 // pred_check
          %p204 = pneg %p87
        $region18: #{tpu_custom_call.1} parent=11 // pred_check_branch
          %206 = sbr.rel (%p204) target = $region20
        $region19: #{tpu_custom_call.1} parent=11 // pred_region
          _
        $region20: #{tpu_custom_call.1} parent=11 // pred_fallthru
          _
        // Predicated region
        $region21: #{tpu_custom_call.1} parent=11 // pred_check
          %p207 = pneg %p108
        $region22: #{tpu_custom_call.1} parent=11 // pred_check_branch
          %209 = sbr.rel (%p207) target = $region24
        $region23: #{tpu_custom_call.1} parent=11 // pred_region
          _
        $region24: #{tpu_custom_call.1} parent=11 // pred_fallthru
          _
        // Predicated region
        $region25: #{tpu_custom_call.1} parent=11 // pred_check
          %p210 = pneg %p129
        $region26: #{tpu_custom_call.1} parent=11 // pred_check_branch
          %212 = sbr.rel (%p210) target = $region28
        $region27: #{tpu_custom_call.1} parent=11 // pred_region
          %s214 = ssub.s32 2048, 2048
          %215 = vsyncadd [#allocation6], %s214
          %s216 = sshll.u32 [#allocation7], 4
          %s217 = int_to_ptr.vmem [resolvable:$true] %s216
          %222 = dma.hbm_to_vmem [thread:$0]  %s4, 2048, %s217, [#allocation6], 128, 128, 8
        $region28: #{tpu_custom_call.1} parent=11 // pred_fallthru
          _
        // Predicated region
        $region29: #{tpu_custom_call.1} parent=11 // pred_check
          %p223 = pneg %p150
        $region30: #{tpu_custom_call.1} parent=11 // pred_check_branch
          %225 = sbr.rel (%p223) target = $region32
        $region31: #{tpu_custom_call.1} parent=11 // pred_region
          _
        $region32: #{tpu_custom_call.1} parent=11 // pred_fallthru
          _
      $region12: #{tpu_custom_call.1} parent=5 // pred_fallthru
        _
      %p226 = scmp.lt.s32.totalorder %s19, 2
      // Predicated region
      $region33: #{tpu_custom_call.1} parent=5 // pred_check
        %p227 = pneg %p226
      $region34: #{tpu_custom_call.1} parent=5 // pred_check_branch
        %229 = sbr.rel (%p227) target = $region36
      $region35: #{tpu_custom_call.1} parent=5 // pred_region
        // Predicated region
        $region37: #{tpu_custom_call.1} parent=35 // pred_check
          %p230 = pneg %p39
        $region38: #{tpu_custom_call.1} parent=35 // pred_check_branch
          %232 = sbr.rel (%p230) target = $region40
        $region39: #{tpu_custom_call.1} parent=35 // pred_region
          %s233 = sand.u32 %s29, 1
          %s234 = scalar_lea.sflag [#allocation3], %s233
          %s235 = sand.u32 %s29, 1
          %s236 = smul.addr %s235, 8
          %s237 = scalar_lea.vmem [#allocation2], %s236
          %s239 = ssub.s32 128, 128
          %240 = vsyncadd %s234, %s239
          %s241 = smul.addr %s19, 128
          %s242 = scalar_lea.hbm %s0, %s241
          %s244 = sshll.u32 %s237, 4
          %s245 = int_to_ptr.vmem [resolvable:$true] %s244
          %247 = dma.hbm_to_vmem [thread:$0]  %s242, 128, %s245, %s234
        $region40: #{tpu_custom_call.1} parent=35 // pred_fallthru
          _
      $region36: #{tpu_custom_call.1} parent=5 // pred_fallthru
        _
      %p248 = scmp.le.s32.totalorder 1, %s19
      %p249 = scmp.lt.s32.totalorder %s19, 3
      %p250 = pnand %p248, %p249
      %p251 = pneg %p250
      // Predicated region
      $region41: #{tpu_custom_call.1} parent=5 // pred_check
        _
      $region42: #{tpu_custom_call.1} parent=5 // pred_check_branch
        %253 = sbr.rel (%p250) target = $region44
      $region43: #{tpu_custom_call.1} parent=5 // pred_region
        %s254 = ssub.s32 %s19, 1
        %s255 = sand.u32 %s32, 1
        %s256 = scalar_lea.sflag [#allocation3], %s255
        %s257 = sand.u32 %s32, 1
        %s258 = smul.addr %s257, 8
        %s259 = scalar_lea.vmem [#allocation2], %s258
        // Predicated region
        $region45: #{tpu_custom_call.1} parent=43 // pred_check
          %p260 = pneg %p45
        $region46: #{tpu_custom_call.1} parent=43 // pred_check_branch
          %262 = sbr.rel (%p260) target = $region48
        $region47: #{tpu_custom_call.1} parent=43 // pred_region
          %263 = dma.done %s256, 128
        $region48: #{tpu_custom_call.1} parent=43 // pred_fallthru
          _
        // Predicated region
        $region49: #{tpu_custom_call.1} parent=43 // pred_check
          %p264 = pneg %p66
        $region50: #{tpu_custom_call.1} parent=43 // pred_check_branch
          %266 = sbr.rel (%p264) target = $region52
        $region51: #{tpu_custom_call.1} parent=43 // pred_region
          %267 = dma.done [#allocation6], 2048
        $region52: #{tpu_custom_call.1} parent=43 // pred_fallthru
          _
        // Predicated region
        $region53: #{tpu_custom_call.1} parent=43 // pred_check
          %p268 = pneg %p129
        $region54: #{tpu_custom_call.1} parent=43 // pred_check_branch
          %270 = sbr.rel (%p268) target = $region56
        $region55: #{tpu_custom_call.1} parent=43 // pred_region
          %271 = dma.done [#allocation6], 2048
        $region56: #{tpu_custom_call.1} parent=43 // pred_fallthru
          _
        %s272 = sand.u32 %s32, 1
        %s273 = scalar_lea.sflag [#allocation3], %s272
        %s274 = sand.u32 %s32, 1
        %s275 = smul.addr %s274, 8
        %s276 = scalar_lea.vmem [#allocation2], %s275
        %p277 = pneg %p45
        %p278 = pneg %p42
        %p279 = pneg %p66
        %p280 = pneg %p63
        %p281 = pneg %p87
        %p282 = pneg %p84
        %p283 = pneg %p108
        %p284 = pneg %p105
        %p285 = pneg %p129
        %p286 = pneg %p126
        %p287 = pneg %p150
        %p288 = pneg %p147
        %p289 = pneg %p176
        %p290 = pneg %p173
        %s291 = sand.u32 %s163, 1
        %s292 = scalar_lea.sflag [#allocation4], %s291
        %s293 = sand.u32 %s163, 1
        %s294 = smul.addr %s293, 8
        %s295 = scalar_lea.vmem [#allocation8], %s294
        %v296 = vld [vmem:[%s259] sm:$0xff]
        %v297 = vld [vmem:[#allocation5] sm:$0xff]
        %v298 = vld [vmem:[#allocation5 + $0x8] sm:$0xff]
        %v299 = vld [vmem:[#allocation5 + $0x10] sm:$0xff]
        %v300 = vld [vmem:[#allocation5 + $0x18] sm:$0xff]
        %v301 = vld [vmem:[#allocation5 + $0x20] sm:$0xff]
        %v302 = vld [vmem:[#allocation5 + $0x28] sm:$0xff]
        %v303 = vld [vmem:[#allocation5 + $0x30] sm:$0xff]
        %v304 = vld [vmem:[#allocation5 + $0x38] sm:$0xff]
        %v305 = vld [vmem:[#allocation5 + $0x40] sm:$0xff]
        %v306 = vld [vmem:[#allocation5 + $0x48] sm:$0xff]
        %v307 = vld [vmem:[#allocation5 + $0x50] sm:$0xff]
        %v308 = vld [vmem:[#allocation5 + $0x58] sm:$0xff]
        %v309 = vld [vmem:[#allocation5 + $0x60] sm:$0xff]
        %v310 = vld [vmem:[#allocation5 + $0x68] sm:$0xff]
        %v311 = vld [vmem:[#allocation5 + $0x70] sm:$0xff]
        %v312 = vld [vmem:[#allocation5 + $0x78] sm:$0xff]
        %313 = vmatprep.subr.mxu0 0.0
        %314 = vmatpush1.msra.mxu0 %v312
        %315 = vmatprep.subr.mxu0 0.0
        %316 = vmatpush1.msra.mxu0 %v311
        %317 = vmatprep.subr.mxu0 0.0
        %318 = vmatpush1.msra.mxu0 %v310
        %319 = vmatprep.subr.mxu0 0.0
        %320 = vmatpush1.msra.mxu0 %v309
        %321 = vmatprep.subr.mxu0 0.0
        %322 = vmatpush1.msra.mxu0 %v308
        %323 = vmatprep.subr.mxu0 0.0
        %324 = vmatpush1.msra.mxu0 %v307
        %325 = vmatprep.subr.mxu0 0.0
        %326 = vmatpush1.msra.mxu0 %v306
        %327 = vmatprep.subr.mxu0 0.0
        %328 = vmatpush1.msra.mxu0 %v305
        %329 = vmatprep.subr.mxu0 0.0
        %330 = vmatpush1.msra.mxu0 %v304
        %331 = vmatprep.subr.mxu0 0.0
        %332 = vmatpush1.msra.mxu0 %v303
        %333 = vmatprep.subr.mxu0 0.0
        %334 = vmatpush1.msra.mxu0 %v302
        %335 = vmatprep.subr.mxu0 0.0
        %336 = vmatpush1.msra.mxu0 %v301
        %337 = vmatprep.subr.mxu0 0.0
        %338 = vmatpush1.msra.mxu0 %v300
        %339 = vmatprep.subr.mxu0 0.0
        %340 = vmatpush1.msra.mxu0 %v299
        %341 = vmatprep.subr.mxu0 0.0
        %342 = vmatpush1.msra.mxu0 %v298
        %343 = vmatprep.subr.mxu0 0.0
        %344 = vmatpush1.msra.mxu0 %v297
        %345 = vmatprep.subr.mxu0 0.0
        %346 = vmatpush2.msra.mxu0 0.0
        %347 = vmatprep.subr.mxu0 0.0
        %348 = vmatpush2.msra.mxu0 0.0
        %349 = vmatprep.subr.mxu0 0.0
        %350 = vmatpush2.msra.mxu0 0.0
        %351 = vmatprep.subr.mxu0 0.0
        %352 = vmatpush2.msra.mxu0 0.0
        %353 = vmatprep.subr.mxu0 0.0
        %354 = vmatpush2.msra.mxu0 0.0
        %355 = vmatprep.subr.mxu0 0.0
        %356 = vmatpush2.msra.mxu0 0.0
        %357 = vmatprep.subr.mxu0 0.0
        %358 = vmatpush2.msra.mxu0 0.0
        %359 = vmatprep.subr.mxu0 0.0
        %360 = vmatpush2.msra.mxu0 0.0
        %361 = vmatprep.subr.mxu0 0.0
        %362 = vmatpush2.msra.mxu0 0.0
        %363 = vmatprep.subr.mxu0 0.0
        %364 = vmatpush2.msra.mxu0 0.0
        %365 = vmatprep.subr.mxu0 0.0
        %366 = vmatpush2.msra.mxu0 0.0
        %367 = vmatprep.subr.mxu0 0.0
        %368 = vmatpush2.msra.mxu0 0.0
        %369 = vmatprep.subr.mxu0 0.0
        %370 = vmatpush2.msra.mxu0 0.0
        %371 = vmatprep.subr.mxu0 0.0
        %372 = vmatpush2.msra.mxu0 0.0
        %373 = vmatprep.subr.mxu0 0.0
        %374 = vmatpush2.msra.mxu0 0.0
        %375 = vmatprep.subr.mxu0 0.0
        %376 = vmatpush2.msra.mxu0 0.0
        %377 = vmatprep.mubr.f32.mxu0 0.0
        %378 = vmatmul.mubr.f32.gmra.mxu0 %v296
        %v379 = vpop.f32.mrf.mxu0
        %v380 = vadd.f32 0.0, %v379
        %v381 = vpop.f32.mrf.mxu0
        %382 = vdwg.mxu0
        %v383 = vld [vmem:[%s2] sm:$0x1]
        %v385 = vlaneseq
        %v386 = vshrl.u32 %v385, 7
        %v387 = vsub.s32 0, %v386
        %v388 = vrot.slane %v383, %v387
        %v390 = vmul.f32 %v380, %v388
        %v391 = vld [vmem:[%s3] sm:$0x1]
        %v393 = vlaneseq
        %v394 = vshrl.u32 %v393, 7
        %v395 = vsub.s32 0, %v394
        %v396 = vrot.slane %v391, %v395
        %v398 = vadd.f32 %v390, %v396
        %v399 = vmax.f32 %v398, 0.0
        %v400 = vld [vmem:[#allocation7] sm:$0xff]
        %v401 = vld [vmem:[#allocation7 + $0x8] sm:$0xff]
        %v402 = vld [vmem:[#allocation7 + $0x10] sm:$0xff]
        %v403 = vld [vmem:[#allocation7 + $0x18] sm:$0xff]
        %v404 = vld [vmem:[#allocation7 + $0x20] sm:$0xff]
        %v405 = vld [vmem:[#allocation7 + $0x28] sm:$0xff]
        %v406 = vld [vmem:[#allocation7 + $0x30] sm:$0xff]
        %v407 = vld [vmem:[#allocation7 + $0x38] sm:$0xff]
        %v408 = vld [vmem:[#allocation7 + $0x40] sm:$0xff]
        %v409 = vld [vmem:[#allocation7 + $0x48] sm:$0xff]
        %v410 = vld [vmem:[#allocation7 + $0x50] sm:$0xff]
        %v411 = vld [vmem:[#allocation7 + $0x58] sm:$0xff]
        %v412 = vld [vmem:[#allocation7 + $0x60] sm:$0xff]
        %v413 = vld [vmem:[#allocation7 + $0x68] sm:$0xff]
        %v414 = vld [vmem:[#allocation7 + $0x70] sm:$0xff]
        %v415 = vld [vmem:[#allocation7 + $0x78] sm:$0xff]
        %v416 = vld [vmem:[%s5] sm:$0x1]
        %v418 = vlaneseq
        %v419 = vshrl.u32 %v418, 7
        %v420 = vsub.s32 0, %v419
        %v421 = vrot.slane %v416, %v420
        %423 = vmatprep.subr.mxu0 0.0
        %424 = vmatpush1.msra.mxu0 %v415
        %425 = vmatprep.subr.mxu0 0.0
        %426 = vmatpush1.msra.mxu0 %v414
        %427 = vmatprep.subr.mxu0 0.0
        %428 = vmatpush1.msra.mxu0 %v413
        %429 = vmatprep.subr.mxu0 0.0
        %430 = vmatpush1.msra.mxu0 %v412
        %431 = vmatprep.subr.mxu0 0.0
        %432 = vmatpush1.msra.mxu0 %v411
        %433 = vmatprep.subr.mxu0 0.0
        %434 = vmatpush1.msra.mxu0 %v410
        %435 = vmatprep.subr.mxu0 0.0
        %436 = vmatpush1.msra.mxu0 %v409
        %437 = vmatprep.subr.mxu0 0.0
        %438 = vmatpush1.msra.mxu0 %v408
        %439 = vmatprep.subr.mxu0 0.0
        %440 = vmatpush1.msra.mxu0 %v407
        %441 = vmatprep.subr.mxu0 0.0
        %442 = vmatpush1.msra.mxu0 %v406
        %443 = vmatprep.subr.mxu0 0.0
        %444 = vmatpush1.msra.mxu0 %v405
        %445 = vmatprep.subr.mxu0 0.0
        %446 = vmatpush1.msra.mxu0 %v404
        %447 = vmatprep.subr.mxu0 0.0
        %448 = vmatpush1.msra.mxu0 %v403
        %449 = vmatprep.subr.mxu0 0.0
        %450 = vmatpush1.msra.mxu0 %v402
        %451 = vmatprep.subr.mxu0 0.0
        %452 = vmatpush1.msra.mxu0 %v401
        %453 = vmatprep.subr.mxu0 0.0
        %454 = vmatpush1.msra.mxu0 %v400
        %455 = vmatprep.subr.mxu0 0.0
        %456 = vmatpush2.msra.mxu0 0.0
        %457 = vmatprep.subr.mxu0 0.0
        %458 = vmatpush2.msra.mxu0 0.0
        %459 = vmatprep.subr.mxu0 0.0
        %460 = vmatpush2.msra.mxu0 0.0
        %461 = vmatprep.subr.mxu0 0.0
        %462 = vmatpush2.msra.mxu0 0.0
        %463 = vmatprep.subr.mxu0 0.0
        %464 = vmatpush2.msra.mxu0 0.0
        %465 = vmatprep.subr.mxu0 0.0
        %466 = vmatpush2.msra.mxu0 0.0
        %467 = vmatprep.subr.mxu0 0.0
        %468 = vmatpush2.msra.mxu0 0.0
        %469 = vmatprep.subr.mxu0 0.0
        %470 = vmatpush2.msra.mxu0 0.0
        %471 = vmatprep.subr.mxu0 0.0
        %472 = vmatpush2.msra.mxu0 0.0
        %473 = vmatprep.subr.mxu0 0.0
        %474 = vmatpush2.msra.mxu0 0.0
        %475 = vmatprep.subr.mxu0 0.0
        %476 = vmatpush2.msra.mxu0 0.0
        %477 = vmatprep.subr.mxu0 0.0
        %478 = vmatpush2.msra.mxu0 0.0
        %479 = vmatprep.subr.mxu0 0.0
        %480 = vmatpush2.msra.mxu0 0.0
        %481 = vmatprep.subr.mxu0 0.0
        %482 = vmatpush2.msra.mxu0 0.0
        %483 = vmatprep.subr.mxu0 0.0
        %484 = vmatpush2.msra.mxu0 0.0
        %485 = vmatprep.subr.mxu0 0.0
        %486 = vmatpush2.msra.mxu0 0.0
        %487 = vmatprep.mubr.f32.mxu0 0.0
        %488 = vmatmul.mubr.f32.gmra.mxu0 %v399
        %v489 = vpop.f32.mrf.mxu0
        %v490 = vadd.f32 %v421, %v489
        %v491 = vpop.f32.mrf.mxu0
        %492 = vdwg.mxu0
        %493 = vst [vmem:[%s295] sm:$0xff] %v490
        %s494 = sand.u32 %s163, 1
        %s495 = scalar_lea.sflag [#allocation4], %s494
        %s496 = sand.u32 %s163, 1
        %s497 = smul.addr %s496, 8
        %s498 = scalar_lea.vmem [#allocation8], %s497
        // Predicated region
        $region57: #{tpu_custom_call.1} parent=43 // pred_check
          %p499 = pneg %p173
        $region58: #{tpu_custom_call.1} parent=43 // pred_check_branch
          %501 = sbr.rel (%p499) target = $region60
        $region59: #{tpu_custom_call.1} parent=43 // pred_region
          %s503 = ssub.s32 128, 128
          %504 = vsyncadd %s495, %s503
          %s505 = smul.addr %s24, 128
          %s506 = scalar_lea.hbm %s6, %s505
          %s508 = sshll.u32 %s498, 4
          %s509 = int_to_ptr.vmem [resolvable:$true] %s508
          %511 = dma.vmem_to_hbm [thread:$0]  %s509, 128, %s506, %s495
        $region60: #{tpu_custom_call.1} parent=43 // pred_fallthru
          _
      $region44: #{tpu_custom_call.1} parent=5 // pred_fallthru
        _
      %p512 = scmp.le.s32.totalorder 2, %s19
      // Predicated region
      $region61: #{tpu_custom_call.1} parent=5 // pred_check
        %p513 = pneg %p512
      $region62: #{tpu_custom_call.1} parent=5 // pred_check_branch
        %515 = sbr.rel (%p513) target = $region64
      $region63: #{tpu_custom_call.1} parent=5 // pred_region
        %s516 = ssub.s32 %s19, 2
        // Predicated region
        $region65: #{tpu_custom_call.1} parent=63 // pred_check
          %p517 = pneg %p179
        $region66: #{tpu_custom_call.1} parent=63 // pred_check_branch
          %519 = sbr.rel (%p517) target = $region68
        $region67: #{tpu_custom_call.1} parent=63 // pred_region
          %s520 = sand.u32 %s164, 1
          %s521 = scalar_lea.sflag [#allocation4], %s520
          %s522 = sand.u32 %s164, 1
          %s523 = smul.addr %s522, 8
          %s524 = scalar_lea.vmem [#allocation8], %s523
          %525 = dma.done %s521, 128
        $region68: #{tpu_custom_call.1} parent=63 // pred_fallthru
          _
      $region64: #{tpu_custom_call.1} parent=5 // pred_fallthru
        _
    $region6: #{tpu_custom_call.1} parent=1 // loop_footer
      %s23 = sadd.s32 1, %s19
    $region7: #{tpu_custom_call.1} parent=1 // loop_footer_branch
      %18 = sbr.rel target = $region3
    $region8: #{tpu_custom_call.1} parent=1 // loop_exit
      _
    %526 = vsyncpa [#allocation3], 1
    %s527 = scalar_lea.sflag [#allocation3], 1
    %528 = vsyncpa %s527, 1
    %529 = vsyncpa [#allocation6], 1
    %530 = vsyncpa [#allocation4], 1
    %s531 = scalar_lea.sflag [#allocation4], 1
    %532 = vsyncpa %s531, 1

</llo_original>
